<compile_context>
chip_gen: v7x
topology: tpu7x:2x2x1
jax: 0.10.0
libtpu: 0.0.40
codegen_flags: <defaults>
</compile_context>

<pallas_src>
import functools

import jax
import jax.numpy as jnp
from jax import lax
from jax.experimental import pallas as pl
from jax.experimental.pallas import tpu as pltpu

BINS = 600
W = 512                  # lane width of the flattened slab (4 lane-tiles)
NLO = 32                 # bin = 32*hi + lo ; lo = idx & 31, hi = idx >> 5
NHI_PAD = 24             # hi in [0, 19), padded to a multiple of 8 sublanes
MAX_BLOCK_ROWS = 512     # (512, 512) f32 = 1 MiB per input block
NCORE = 2                # leading 'parallel' grid axis for passes 2/3


# --------------------------------------------------------------------------
# pass 1: running per-lane min / max of the teacher features
# --------------------------------------------------------------------------
def _minmax_kernel(t_ref, mn_ref, mx_ref, *, tr, n, has_tail):
    i = pl.program_id(0)

    @pl.when(i == 0)
    def _():
        mn_ref[...] = jnp.full((8, W), jnp.inf, jnp.float32)
        mx_ref[...] = jnp.full((8, W), -jnp.inf, jnp.float32)

    def _reduce(mask_pad):
        if mask_pad:
            sub = lax.broadcasted_iota(jnp.int32, (8, W), 0)
            lane = lax.broadcasted_iota(jnp.int32, (8, W), 1)
            base = i * (tr * W)

        def body(g, carry):
            mn_c, mx_c = carry
            r0 = pl.multiple_of(g * 8, 8)
            v = t_ref[pl.ds(r0, 8), :]
            if mask_pad:  # only the last block carries zero padding
                eid = base + (r0 + sub) * W + lane
                valid = eid < n
                mn_c = jnp.minimum(mn_c, jnp.where(valid, v, jnp.inf))
                mx_c = jnp.maximum(mx_c, jnp.where(valid, v, -jnp.inf))
            else:
                mn_c = jnp.minimum(mn_c, v)
                mx_c = jnp.maximum(mx_c, v)
            return mn_c, mx_c

        init = (jnp.full((8, W), jnp.inf, jnp.float32),
                jnp.full((8, W), -jnp.inf, jnp.float32))
        return lax.fori_loop(0, tr // 8, body, init)

    def _update(mask_pad):
        mn_b, mx_b = _reduce(mask_pad)
        mn_ref[...] = jnp.minimum(mn_ref[...], mn_b)
        mx_ref[...] = jnp.maximum(mx_ref[...], mx_b)

    if not has_tail:
        _update(False)
    else:
        last = pl.num_programs(0) - 1

        @pl.when(i != last)
        def _():
            _update(False)

        @pl.when(i == last)
        def _():
            _update(True)


# --------------------------------------------------------------------------
# pass 2: global 600-bin histogram via factorised one-hot MXU matmuls
#   counts[hi, lo] += A @ B^T   with A=(24,K), B=(32,K) one-hots, K=512/row.
#   Exact (0/1 operands, f32 accumulation) while every bin stays < 2^24.
# --------------------------------------------------------------------------
def _hist_kernel(params_ref, t_ref, counts_ref, hi_scr, lo_scr, *, tr):
    j = pl.program_id(1)
    tmin = params_ref[0]
    inv_bin = params_ref[1]

    @pl.when(j == 0)
    def _():
        counts_ref[...] = jnp.zeros_like(counts_ref)

    # loop-invariant iotas hoisted (JAX does not CSE broadcast_in_dim).
    iota_hi = lax.broadcasted_iota(jnp.int32, (NHI_PAD, W), 0)
    iota_lo = lax.broadcasted_iota(jnp.int32, (NLO, W), 0)

    def group_body(g, acc):
        r0 = pl.multiple_of(g * 8, 8)
        t8 = t_ref[pl.ds(r0, 8), :]                               # (8, W) dense
        idx = jnp.clip(jnp.floor((t8 - tmin) * inv_bin),
                       0.0, float(BINS - 1)).astype(jnp.int32)
        hi_scr[...] = jnp.right_shift(idx, 5)
        lo_scr[...] = jnp.bitwise_and(idx, NLO - 1)
        for s in range(8):                                        # unrolled
            hi_b = jnp.broadcast_to(hi_scr[pl.ds(s, 1), :], (NHI_PAD, W))
            lo_b = jnp.broadcast_to(lo_scr[pl.ds(s, 1), :], (NLO, W))
            a = (hi_b == iota_hi).astype(jnp.float32)             # (24, W)
            b = (lo_b == iota_lo).astype(jnp.float32)             # (32, W)
            acc = acc + lax.dot_general(a, b, (((1,), (1,)), ((), ())),
                                        preferred_element_type=jnp.float32)
        return acc

    block_counts = lax.fori_loop(
        0, tr // 8, group_body, jnp.zeros((NHI_PAD, NLO), jnp.float32))
    counts_ref[...] += block_counts                               # resident acc


# --------------------------------------------------------------------------
# pass 3: per-element gather of the normalised histogram + weighted L1 sum
#   res_e = sum_h A[h,e] * (table @ B)[h,e]  (gather by matmul, f32 table)
# --------------------------------------------------------------------------
def _loss_kernel(params_ref, table_ref, s_ref, t_ref, out_ref,
                 hi_scr, lo_scr, res_scr, *, tr, beta):
    j = pl.program_id(1)
    tmin = params_ref[0]
    inv_bin = params_ref[1]
    table = table_ref[...]                                        # (24, 32) f32

    @pl.when(j == 0)
    def _():
        out_ref[...] = jnp.zeros_like(out_ref)

    iota_hi = lax.broadcasted_iota(jnp.int32, (NHI_PAD, W), 0)
    iota_lo = lax.broadcasted_iota(jnp.int32, (NLO, W), 0)

    def group_body(g, part):
        r0 = pl.multiple_of(g * 8, 8)
        t8 = t_ref[pl.ds(r0, 8), :]                               # (8, W)
        s8 = s_ref[pl.ds(r0, 8), :]
        idx = jnp.clip(jnp.floor((t8 - tmin) * inv_bin),
                       0.0, float(BINS - 1)).astype(jnp.int32)
        hi_scr[...] = jnp.right_shift(idx, 5)
        lo_scr[...] = jnp.bitwise_and(idx, NLO - 1)
        for s in range(8):
            hi_b = jnp.broadcast_to(hi_scr[pl.ds(s, 1), :], (NHI_PAD, W))
            lo_b = jnp.broadcast_to(lo_scr[pl.ds(s, 1), :], (NLO, W))
            a = (hi_b == iota_hi).astype(jnp.float32)             # (24, W)
            b = (lo_b == iota_lo).astype(jnp.float32)             # (32, W)
            p = jnp.dot(table, b, preferred_element_type=jnp.float32)  # (24, W)
            res_scr[pl.ds(s, 1), :] = jnp.sum(a * p, axis=0, keepdims=True)
        res8 = res_scr[...]                                       # (8, W)
        wgt = jnp.exp(jnp.abs(t8) * beta + res8)                  # dense EUP exp
        # padded tail elements have s == t == 0, so they contribute exactly 0.
        return part + jnp.abs(wgt * (s8 - t8))

    part = lax.fori_loop(0, tr // 8, group_body, jnp.zeros((8, W), jnp.float32))
    out_ref[...] += jnp.sum(part)                                 # one reduce / block


# --------------------------------------------------------------------------
# wrapper
# --------------------------------------------------------------------------
def feature_loss_v1(feat_student, feat_teacher, beta=0.1, loss_weight=1.0):
    assert feat_student.shape == feat_teacher.shape
    n = int(feat_teacher.size)
    rows = pl.cdiv(n, W)
    tr = min(MAX_BLOCK_ROWS, ((rows + 7) // 8) * 8)
    nb = pl.cdiv(rows, tr)          # blocks holding real data (pass-1 grid)
    nb_core = pl.cdiv(nb, NCORE)    # blocks per core for passes 2/3
    rows_pad = NCORE * nb_core * tr
    npad = rows_pad * W
    pad = npad - n
    has_tail = (nb * tr * W) > n

    def _flat(x):
        # One fused pad+reshape per tensor into a lane-dense (rows_pad, W) slab.
        x = jnp.ravel(x).astype(jnp.float32)
        if pad:
            x = jnp.pad(x, (0, pad))
        return x.reshape(rows_pad, W)

    s2 = _flat(feat_student)
    t2 = _flat(feat_teacher)

    # ---------------- pass 1: global min / max -----------------------------
    mn8, mx8 = pl.pallas_call(
        functools.partial(_minmax_kernel, tr=tr, n=n, has_tail=has_tail),
        grid=(nb,),
        in_specs=[pl.BlockSpec((tr, W), lambda i: (i, 0))],
        out_specs=(pl.BlockSpec((8, W), lambda i: (0, 0)),
                   pl.BlockSpec((8, W), lambda i: (0, 0))),
        out_shape=(jax.ShapeDtypeStruct((8, W), jnp.float32),
                   jax.ShapeDtypeStruct((8, W), jnp.float32)),
        compiler_params=pltpu.CompilerParams(
            dimension_semantics=("arbitrary",)),
    )(t2)
    tmin = jnp.min(mn8)
    tmax = jnp.max(mx8)

    # guard degenerate constant teacher (PyTorch would produce NaN here; we
    # intentionally return a finite value instead).
    bin_size = jnp.where(tmax > tmin, (tmax - tmin) / BINS, jnp.float32(1.0))
    inv_bin = (1.0 / bin_size).astype(jnp.float32)
    params = jnp.stack([tmin, inv_bin]).astype(jnp.float32)   # SMEM scalars

    # ---------------- pass 2: 600-bin histogram ----------------------------
    counts2 = pl.pallas_call(
        functools.partial(_hist_kernel, tr=tr),
        grid_spec=pltpu.PrefetchScalarGridSpec(
            num_scalar_prefetch=1,
            grid=(NCORE, nb_core),
            in_specs=[pl.BlockSpec((tr, W),
                                   lambda c, j, p: (c * nb_core + j, 0))],
            out_specs=pl.BlockSpec((None, NHI_PAD, NLO),
                                   lambda c, j, p: (c, 0, 0)),
            scratch_shapes=[pltpu.VMEM((8, W), jnp.int32),
                            pltpu.VMEM((8, W), jnp.int32)],
        ),
        out_shape=jax.ShapeDtypeStruct((NCORE, NHI_PAD, NLO), jnp.float32),
        compiler_params=pltpu.CompilerParams(
            dimension_semantics=("parallel", "arbitrary")),
    )(params, t2)

    # tiny glue math in plain XLA: pad fix-up, hisc, res.sum(), gather table.
    counts = jnp.sum(counts2, axis=0).reshape(-1)[:BINS]
    # all zero-pad elements land in the bin of value 0.0 (same f32 math as the
    # kernel); subtract them once instead of masking every row in the kernel.
    idx0 = jnp.clip(jnp.floor((jnp.float32(0.0) - tmin) * inv_bin),
                    0.0, float(BINS - 1)).astype(jnp.int32)
    counts = counts.at[idx0].add(jnp.float32(-pad))
    hisc = counts / jnp.float32(n)
    res_sum = jnp.sum(counts * hisc)                  # == sum_e hisc[idx_e]
    table = jnp.zeros((NHI_PAD * NLO,), jnp.float32)
    table = table.at[:BINS].set(hisc / res_sum).reshape(NHI_PAD, NLO)  # f32

    # ---------------- pass 3: gather + weighted L1 reduction ---------------
    out = pl.pallas_call(
        functools.partial(_loss_kernel, tr=tr, beta=float(beta)),
        grid_spec=pltpu.PrefetchScalarGridSpec(
            num_scalar_prefetch=1,
            grid=(NCORE, nb_core),
            in_specs=[pl.BlockSpec((NHI_PAD, NLO), lambda c, j, p: (0, 0)),
                      pl.BlockSpec((tr, W),
                                   lambda c, j, p: (c * nb_core + j, 0)),
                      pl.BlockSpec((tr, W),
                                   lambda c, j, p: (c * nb_core + j, 0))],
            out_specs=pl.BlockSpec((None, 8, 128), lambda c, j, p: (c, 0, 0)),
            scratch_shapes=[pltpu.VMEM((8, W), jnp.int32),
                            pltpu.VMEM((8, W), jnp.int32),
                            pltpu.VMEM((8, W), jnp.float32)],
        ),
        out_shape=jax.ShapeDtypeStruct((NCORE, 8, 128), jnp.float32),
        compiler_params=pltpu.CompilerParams(
            dimension_semantics=("parallel", "arbitrary")),
    )(params, table, s2, t2)

    total = out[0, 0, 0] + out[1, 0, 0]
    # loss_weight and mean-normalisation folded out of the hot loop.
    return total * jnp.float32(loss_weight / n)


# --------------------------------------------------------------------------
# pure-JAX reference mirroring the PyTorch math (for validation)
# --------------------------------------------------------------------------
def _reference_loss(feat_student, feat_teacher, beta=0.1, loss_weight=1.0,
                    bins=BINS):
    tf = feat_teacher.reshape(-1).astype(jnp.float32)
    sf = feat_student.reshape(-1).astype(jnp.float32)
    tmin, tmax = tf.min(), tf.max()
    bin_size = (tmax - tmin) / bins
    idx = jnp.clip(jnp.floor((tf - tmin) / bin_size), 0, bins - 1).astype(jnp.int32)
    count = jnp.zeros((bins,), jnp.float32).at[idx].add(1.0)
    hisc = count / tf.size
    res = hisc[idx]
    res = res / res.sum()
    w = loss_weight * jnp.exp(jnp.abs(tf) * beta + res)
    return jnp.mean(jnp.abs(w * (sf - tf)))


if __name__ == "__main__":
    key = jax.random.PRNGKey(0)
    k_s, k_t, k_s2, k_t2 = jax.random.split(key, 4)

    # small NCHW feature maps, as the PyTorch module would receive
    feat_student = jax.random.normal(k_s, (2, 4, 16, 16), dtype=jnp.float32)
    feat_teacher = jax.random.normal(k_t, (2, 4, 16, 16), dtype=jnp.float32)

    loss = feature_loss_v1(feat_student, feat_teacher, beta=0.1, loss_weight=1.0)
    loss = jax.block_until_ready(loss)
    ref = jax.block_until_ready(_reference_loss(feat_student, feat_teacher))
    assert jnp.allclose(loss, ref, rtol=2e-3, atol=1e-5), (loss, ref)

    # ragged size exercising the zero-padded tail / masking / fix-up path
    fs = jax.random.normal(k_s2, (2, 3, 7, 5), dtype=jnp.float32)
    ft = jax.random.normal(k_t2, (2, 3, 7, 5), dtype=jnp.float32)
    loss2 = jax.block_until_ready(feature_loss_v1(fs, ft, beta=0.1, loss_weight=1.0))
    ref2 = jax.block_until_ready(_reference_loss(fs, ft))
    assert jnp.allclose(loss2, ref2, rtol=2e-3, atol=1e-5), (loss2, ref2)

    print("KERNEL_OK")
</pallas_src>

<mosaic_0001>
module attributes {stable_mosaic.version = 11 : i64} {
  func.func @_minmax_kernel(%arg0: i32, %arg1: memref<8x512xf32, #tpu.memory_space<vmem>>, %arg2: memref<8x512xf32, #tpu.memory_space<vmem>>, %arg3: memref<8x512xf32, #tpu.memory_space<vmem>>) attributes {dimension_semantics = [#tpu.dimension_semantics<arbitrary>], iteration_bounds = array<i64: 1>, scalar_prefetch = 0 : i64, scratch_operands = 0 : i64, tpu.core_type = #tpu.core_type<tc>, window_params = [{transform_indices = @transform_0, window_bounds = array<i64: 8, 512>}, {pipeline_mode = #tpu.pipeline_mode<synchronous>, transform_indices = @transform_1, window_bounds = array<i64: 8, 512>}, {pipeline_mode = #tpu.pipeline_mode<synchronous>, transform_indices = @transform_2, window_bounds = array<i64: 8, 512>}]} {
    %c0_i32 = arith.constant 0 : i32
    %0 = arith.cmpi eq, %arg0, %c0_i32 : i32
    %1 = arith.extui %0 : i1 to i32
    %c0_i32_0 = arith.constant 0 : i32
    %2 = arith.cmpi ne, %1, %c0_i32_0 : i32
    scf.if %2 {
      %cst = arith.constant 0x7F800000 : f32
      %9 = vector.broadcast %cst : f32 to vector<8x512xf32>
      %c0 = arith.constant 0 : index
      %c0_5 = arith.constant 0 : index
      %10 = vector.load %arg2[%c0, %c0_5] : memref<8x512xf32, #tpu.memory_space<vmem>>, vector<8x512xf32>
      tpu.vector_store %arg2[%c0, %c0_5], %9 {strides = array<i32>} : memref<8x512xf32, #tpu.memory_space<vmem>>, vector<8x512xf32>,
      %cst_6 = arith.constant 0xFF800000 : f32
      %11 = vector.broadcast %cst_6 : f32 to vector<8x512xf32>
      %c0_7 = arith.constant 0 : index
      %c0_8 = arith.constant 0 : index
      %12 = vector.load %arg3[%c0_7, %c0_8] : memref<8x512xf32, #tpu.memory_space<vmem>>, vector<8x512xf32>
      tpu.vector_store %arg3[%c0_7, %c0_8], %11 {strides = array<i32>} : memref<8x512xf32, #tpu.memory_space<vmem>>, vector<8x512xf32>,
    } else {
    }
    %c0_i32_1 = arith.constant 0 : i32
    %3 = arith.cmpi ne, %arg0, %c0_i32_1 : i32
    %4 = arith.extui %3 : i1 to i32
    %c0_i32_2 = arith.constant 0 : i32
    %5 = arith.cmpi ne, %4, %c0_i32_2 : i32
    scf.if %5 {
      %cst = arith.constant 0x7F800000 : f32
      %9 = vector.broadcast %cst : f32 to vector<8x512xf32>
      %cst_5 = arith.constant 0xFF800000 : f32
      %10 = vector.broadcast %cst_5 : f32 to vector<8x512xf32>
      %c0_i32_6 = arith.constant 0 : i32
      %c8_i32 = arith.constant 8 : i32
      %11 = arith.muli %c0_i32_6, %c8_i32 : i32
      %12 = tpu.assume_multiple %11, 8 : i32
      %13 = arith.index_cast %12 : i32 to index
      %c0 = arith.constant 0 : index
      %14 = vector.load %arg1[%13, %c0] : memref<8x512xf32, #tpu.memory_space<vmem>>, vector<8x512xf32>
      %15 = arith.minimumf %9, %14 : vector<8x512xf32>
      %16 = arith.maximumf %10, %14 : vector<8x512xf32>
      %c1_i32 = arith.constant 1 : i32
      %c0_7 = arith.constant 0 : index
      %c0_8 = arith.constant 0 : index
      %17 = vector.load %arg2[%c0_7, %c0_8] : memref<8x512xf32, #tpu.memory_space<vmem>>, vector<8x512xf32>
      %18 = arith.minimumf %17, %15 : vector<8x512xf32>
      %c0_9 = arith.constant 0 : index
      %c0_10 = arith.constant 0 : index
      %19 = vector.load %arg2[%c0_9, %c0_10] : memref<8x512xf32, #tpu.memory_space<vmem>>, vector<8x512xf32>
      tpu.vector_store %arg2[%c0_9, %c0_10], %18 {strides = array<i32>} : memref<8x512xf32, #tpu.memory_space<vmem>>, vector<8x512xf32>,
      %c0_11 = arith.constant 0 : index
      %c0_12 = arith.constant 0 : index
      %20 = vector.load %arg3[%c0_11, %c0_12] : memref<8x512xf32, #tpu.memory_space<vmem>>, vector<8x512xf32>
      %21 = arith.maximumf %20, %16 : vector<8x512xf32>
      %c0_13 = arith.constant 0 : index
      %c0_14 = arith.constant 0 : index
      %22 = vector.load %arg3[%c0_13, %c0_14] : memref<8x512xf32, #tpu.memory_space<vmem>>, vector<8x512xf32>
      tpu.vector_store %arg3[%c0_13, %c0_14], %21 {strides = array<i32>} : memref<8x512xf32, #tpu.memory_space<vmem>>, vector<8x512xf32>,
    } else {
    }
    %c0_i32_3 = arith.constant 0 : i32
    %6 = arith.cmpi eq, %arg0, %c0_i32_3 : i32
    %7 = arith.extui %6 : i1 to i32
    %c0_i32_4 = arith.constant 0 : i32
    %8 = arith.cmpi ne, %7, %c0_i32_4 : i32
    scf.if %8 {
      %9 = tpu.iota {dimensions = array<i32: 0>} : vector<8x512xi32>
      %10 = tpu.iota {dimensions = array<i32: 1>} : vector<8x512xi32>
      %c4096_i32 = arith.constant 4096 : i32
      %11 = arith.muli %arg0, %c4096_i32 : i32
      %cst = arith.constant 0x7F800000 : f32
      %12 = vector.broadcast %cst : f32 to vector<8x512xf32>
      %cst_5 = arith.constant 0xFF800000 : f32
      %13 = vector.broadcast %cst_5 : f32 to vector<8x512xf32>
      %c0_i32_6 = arith.constant 0 : i32
      %c8_i32 = arith.constant 8 : i32
      %14 = arith.muli %c0_i32_6, %c8_i32 : i32
      %15 = tpu.assume_multiple %14, 8 : i32
      %16 = arith.index_cast %15 : i32 to index
      %c0 = arith.constant 0 : index
      %17 = vector.load %arg1[%16, %c0] : memref<8x512xf32, #tpu.memory_space<vmem>>, vector<8x512xf32>
      %18 = vector.broadcast %15 : i32 to vector<8x512xi32>
      %19 = arith.addi %18, %9 : vector<8x512xi32>
      %c512_i32 = arith.constant 512 : i32
      %20 = vector.broadcast %c512_i32 : i32 to vector<8x512xi32>
      %21 = arith.muli %19, %20 : vector<8x512xi32>
      %22 = vector.broadcast %11 : i32 to vector<8x512xi32>
      %23 = arith.addi %22, %21 : vector<8x512xi32>
      %24 = arith.addi %23, %10 : vector<8x512xi32>
      %c2048_i32 = arith.constant 2048 : i32
      %25 = vector.broadcast %c2048_i32 : i32 to vector<8x512xi32>
      %26 = arith.cmpi slt, %24, %25 : vector<8x512xi32>
      %cst_7 = arith.constant 0x7F800000 : f32
      %27 = vector.broadcast %cst_7 : f32 to vector<8x512xf32>
      %28 = arith.select %26, %17, %27 : vector<8x512xi1>, vector<8x512xf32>
      %29 = arith.minimumf %12, %28 : vector<8x512xf32>
      %cst_8 = arith.constant 0xFF800000 : f32
      %30 = vector.broadcast %cst_8 : f32 to vector<8x512xf32>
      %31 = arith.select %26, %17, %30 : vector<8x512xi1>, vector<8x512xf32>
      %32 = arith.maximumf %13, %31 : vector<8x512xf32>
      %c1_i32 = arith.constant 1 : i32
      %c0_9 = arith.constant 0 : index
      %c0_10 = arith.constant 0 : index
      %33 = vector.load %arg2[%c0_9, %c0_10] : memref<8x512xf32, #tpu.memory_space<vmem>>, vector<8x512xf32>
      %34 = arith.minimumf %33, %29 : vector<8x512xf32>
      %c0_11 = arith.constant 0 : index
      %c0_12 = arith.constant 0 : index
      %35 = vector.load %arg2[%c0_11, %c0_12] : memref<8x512xf32, #tpu.memory_space<vmem>>, vector<8x512xf32>
      tpu.vector_store %arg2[%c0_11, %c0_12], %34 {strides = array<i32>} : memref<8x512xf32, #tpu.memory_space<vmem>>, vector<8x512xf32>,
      %c0_13 = arith.constant 0 : index
      %c0_14 = arith.constant 0 : index
      %36 = vector.load %arg3[%c0_13, %c0_14] : memref<8x512xf32, #tpu.memory_space<vmem>>, vector<8x512xf32>
      %37 = arith.maximumf %36, %32 : vector<8x512xf32>
      %c0_15 = arith.constant 0 : index
      %c0_16 = arith.constant 0 : index
      %38 = vector.load %arg3[%c0_15, %c0_16] : memref<8x512xf32, #tpu.memory_space<vmem>>, vector<8x512xf32>
      tpu.vector_store %arg3[%c0_15, %c0_16], %37 {strides = array<i32>} : memref<8x512xf32, #tpu.memory_space<vmem>>, vector<8x512xf32>,
    } else {
    }
    return
  }
  func.func @transform_0(%arg0: i32) -> (i32, i32) {
    %c0_i32 = arith.constant 0 : i32
    %c0_i32_0 = arith.constant 0 : i32
    return %arg0, %c0_i32 : i32, i32
  }
  func.func @transform_1(%arg0: i32) -> (i32, i32) {
    %c0_i32 = arith.constant 0 : i32
    %c0_i32_0 = arith.constant 0 : i32
    %c0_i32_1 = arith.constant 0 : i32
    return %c0_i32, %c0_i32_0 : i32, i32
  }
  func.func @transform_2(%arg0: i32) -> (i32, i32) {
    %c0_i32 = arith.constant 0 : i32
    %c0_i32_0 = arith.constant 0 : i32
    %c0_i32_1 = arith.constant 0 : i32
    return %c0_i32, %c0_i32_0 : i32, i32
  }
}

</mosaic_0001>

<llo_original>
// kernel: tpu_custom_call.1
$region0: #{tpu_custom_call.1}
  #allocation0 [shape = 'u32[]', space=smem, size = 0x4, offset = 0x4, fixed_abs, tag = 'smem constant byte address 0x4 - core index']
  #allocation1 [shape = 'u32[144,128]{1,0:T(1,128)}', space=vmem, size = 0x12000, scoped, tag = 'internal scratch']
  %s0 = inlined_call_operand.hbm [shape: f32[16,512], index: 0, kind: input, shape index: {}]
  %s1 = inlined_call_operand.hbm [shape: f32[8,512], index: 1, kind: output, shape index: {0}]
  %s2 = inlined_call_operand.hbm [shape: f32[8,512], index: 2, kind: output, shape index: {1}]
  %3 = xla_tuple %s1, %s2
  %s4 = sld [smem:[#allocation0]]
  $region38: #{tpu_custom_call.1} parent=0
    _
  %s6 = ssub.s32 1, %s4
  %s7 = scalar_select 0, %s6, %s4
  $region1: #{tpu_custom_call.1} parent=0
    #allocation2 [shape = 'u8[16384]{0}', space=vmem, size = 0x4000, scoped, tag = 'input window, operand 0, single buffered']
    #allocation3 [shape = 's32[1]{0}', space=sflag, size = 0x4, scoped, tag = 'scoped memory for tpu_custom_call.1']
    #allocation4 [shape = 's32[1]{0}', space=sflag, size = 0x4, scoped, tag = 'scoped memory for tpu_custom_call.1']
    #allocation5 [shape = 'u8[16384]{0}', space=vmem, size = 0x4000, scoped, tag = 'output window, operand 0, single buffered']
    #allocation6 [shape = 'u8[16384]{0}', space=vmem, size = 0x4000, scoped, tag = 'output window, operand 1, single buffered']
    #allocation7 [shape = 's32[1]{0}', space=sflag, size = 0x4, scoped, tag = 'scoped memory for tpu_custom_call.1']
    %8 = vsyncpa [#allocation3], 0
    %9 = vsyncpa [#allocation4], 0
    %10 = vsyncpa [#allocation7], 0
    // Predicated region
    $region2: #{tpu_custom_call.1} parent=1 // pred_check
      _
    $region3: #{tpu_custom_call.1} parent=1 // pred_check_branch
      %12 = sbr.rel (0) target = $region5
    $region4: #{tpu_custom_call.1} parent=1 // pred_region
      %s14 = ssub.s32 512, 512
      %15 = vsyncadd [#allocation3], %s14
      %s17 = sshll.u32 [#allocation2], 4
      %s18 = int_to_ptr.vmem [resolvable:$true] %s17
      %20 = dma.hbm_to_vmem [thread:$0]  %s0, 512, %s18, [#allocation3]
    $region5: #{tpu_custom_call.1} parent=1 // pred_fallthru
      _
    // Predicated region
    $region6: #{tpu_custom_call.1} parent=1 // pred_check
      _
    $region7: #{tpu_custom_call.1} parent=1 // pred_check_branch
      %22 = sbr.rel (0) target = $region9
    $region8: #{tpu_custom_call.1} parent=1 // pred_region
      %23 = dma.done [#allocation3], 512
    $region9: #{tpu_custom_call.1} parent=1 // pred_fallthru
      _
    %p24 = scmp.eq.s32.totalorder 0, 0
    // Predicated region
    $region10: #{tpu_custom_call.1} parent=1 // pred_check
      %p25 = pneg %p24
    $region11: #{tpu_custom_call.1} parent=1 // pred_check_branch
      %27 = sbr.rel (%p25) target = $region13
    $region12: #{tpu_custom_call.1} parent=1 // pred_region
      %28 = vst [vmem:[#allocation5] sm:$0xff] inf
      %29 = vst [vmem:[#allocation5 + $0x8] sm:$0xff] inf
      %30 = vst [vmem:[#allocation5 + $0x10] sm:$0xff] inf
      %31 = vst [vmem:[#allocation5 + $0x18] sm:$0xff] inf
      %32 = vst [vmem:[#allocation6] sm:$0xff] -inf
      %33 = vst [vmem:[#allocation6 + $0x8] sm:$0xff] -inf
      %34 = vst [vmem:[#allocation6 + $0x10] sm:$0xff] -inf
      %35 = vst [vmem:[#allocation6 + $0x18] sm:$0xff] -inf
    $region13: #{tpu_custom_call.1} parent=1 // pred_fallthru
      _
    %p36 = scmp.ne.s32.totalorder 0, 0
    // Predicated region
    $region14: #{tpu_custom_call.1} parent=1 // pred_check
      %p37 = pneg %p36
    $region15: #{tpu_custom_call.1} parent=1 // pred_check_branch
      %39 = sbr.rel (%p37) target = $region17
    $region16: #{tpu_custom_call.1} parent=1 // pred_region
      %s40 = smul.u32 0, 4
      %s41 = smul.addr %s40, 8
      %s42 = scalar_lea.vmem [#allocation2], %s41
      %v43 = vld [vmem:[%s42] sm:$0xff]
      %v44 = vld [vmem:[%s42 + $0x8] sm:$0xff]
      %v45 = vld [vmem:[%s42 + $0x10] sm:$0xff]
      %v46 = vld [vmem:[%s42 + $0x18] sm:$0xff]
      %v47 = vld [vmem:[#allocation5] sm:$0xff]
      %v48 = vld [vmem:[#allocation5 + $0x8] sm:$0xff]
      %v49 = vld [vmem:[#allocation5 + $0x10] sm:$0xff]
      %v50 = vld [vmem:[#allocation5 + $0x18] sm:$0xff]
      %v51 = vmin.f32 %v47, %v43
      %v52 = vmin.f32 %v48, %v44
      %v53 = vmin.f32 %v49, %v45
      %v54 = vmin.f32 %v50, %v46
      %55 = vst [vmem:[#allocation5] sm:$0xff] %v51
      %56 = vst [vmem:[#allocation5 + $0x8] sm:$0xff] %v52
      %57 = vst [vmem:[#allocation5 + $0x10] sm:$0xff] %v53
      %58 = vst [vmem:[#allocation5 + $0x18] sm:$0xff] %v54
      %v59 = vld [vmem:[#allocation6] sm:$0xff]
      %v60 = vld [vmem:[#allocation6 + $0x8] sm:$0xff]
      %v61 = vld [vmem:[#allocation6 + $0x10] sm:$0xff]
      %v62 = vld [vmem:[#allocation6 + $0x18] sm:$0xff]
      %v63 = vmax.f32 %v59, %v43
      %v64 = vmax.f32 %v60, %v44
      %v65 = vmax.f32 %v61, %v45
      %v66 = vmax.f32 %v62, %v46
      %67 = vst [vmem:[#allocation6] sm:$0xff] %v63
      %68 = vst [vmem:[#allocation6 + $0x8] sm:$0xff] %v64
      %69 = vst [vmem:[#allocation6 + $0x10] sm:$0xff] %v65
      %70 = vst [vmem:[#allocation6 + $0x18] sm:$0xff] %v66
    $region17: #{tpu_custom_call.1} parent=1 // pred_fallthru
      _
    // Predicated region
    $region18: #{tpu_custom_call.1} parent=1 // pred_check
      %p71 = pneg %p24
    $region19: #{tpu_custom_call.1} parent=1 // pred_check_branch
      %73 = sbr.rel (%p71) target = $region21
    $region20: #{tpu_custom_call.1} parent=1 // pred_region
      %v74 = vlaneseq
      %v75 = vshrl.u32 %v74, 7
      %v76 = vlaneseq
      %v77 = vand.u32 %v76, 127
      %v78 = vadd.s32 %v77, 128
      %v79 = vadd.s32 %v77, 256
      %v80 = vadd.s32 %v77, 384
      %s81 = smul.u32 0, 4096
      %s82 = smul.u32 0, 4
      %s83 = smul.addr %s82, 8
      %s84 = scalar_lea.vmem [#allocation2], %s83
      %v85 = vld [vmem:[%s84] sm:$0xff]
      %v86 = vld [vmem:[%s84 + $0x8] sm:$0xff]
      %v87 = vld [vmem:[%s84 + $0x10] sm:$0xff]
      %v88 = vld [vmem:[%s84 + $0x18] sm:$0xff]
      %v89 = vstv 0
      %v90 = vadd.s32 %v89, %v75
      %v91 = vmul.u32 %v90, 512
      %v92 = vstv %s81
      %v93 = vadd.s32 %v92, %v91
      %v94 = vadd.s32 %v93, %v77
      %v95 = vadd.s32 %v93, %v78
      %v96 = vadd.s32 %v93, %v79
      %v97 = vadd.s32 %v93, %v80
      %vm98 = vcmp.lt.s32.totalorder %v94, 2048
      %vm99 = vcmp.lt.s32.totalorder %v95, 2048
      %vm100 = vcmp.lt.s32.totalorder %v96, 2048
      %vm101 = vcmp.lt.s32.totalorder %v97, 2048
      %v102 = vsel %vm98, %v85, inf
      %v103 = vsel %vm99, %v86, inf
      %v104 = vsel %vm100, %v87, inf
      %v105 = vsel %vm101, %v88, inf
      %v106 = vsel %vm98, %v85, -inf
      %v107 = vsel %vm99, %v86, -inf
      %v108 = vsel %vm100, %v87, -inf
      %v109 = vsel %vm101, %v88, -inf
      %v110 = vld [vmem:[#allocation5] sm:$0xff]
      %v111 = vld [vmem:[#allocation5 + $0x8] sm:$0xff]
      %v112 = vld [vmem:[#allocation5 + $0x10] sm:$0xff]
      %v113 = vld [vmem:[#allocation5 + $0x18] sm:$0xff]
      %v114 = vmin.f32 %v110, %v102
      %v115 = vmin.f32 %v111, %v103
      %v116 = vmin.f32 %v112, %v104
      %v117 = vmin.f32 %v113, %v105
      %118 = vst [vmem:[#allocation5] sm:$0xff] %v114
      %119 = vst [vmem:[#allocation5 + $0x8] sm:$0xff] %v115
      %120 = vst [vmem:[#allocation5 + $0x10] sm:$0xff] %v116
      %121 = vst [vmem:[#allocation5 + $0x18] sm:$0xff] %v117
      %v122 = vld [vmem:[#allocation6] sm:$0xff]
      %v123 = vld [vmem:[#allocation6 + $0x8] sm:$0xff]
      %v124 = vld [vmem:[#allocation6 + $0x10] sm:$0xff]
      %v125 = vld [vmem:[#allocation6 + $0x18] sm:$0xff]
      %v126 = vmax.f32 %v122, %v106
      %v127 = vmax.f32 %v123, %v107
      %v128 = vmax.f32 %v124, %v108
      %v129 = vmax.f32 %v125, %v109
      %130 = vst [vmem:[#allocation6] sm:$0xff] %v126
      %131 = vst [vmem:[#allocation6 + $0x8] sm:$0xff] %v127
      %132 = vst [vmem:[#allocation6 + $0x10] sm:$0xff] %v128
      %133 = vst [vmem:[#allocation6 + $0x18] sm:$0xff] %v129
    $region21: #{tpu_custom_call.1} parent=1 // pred_fallthru
      _
    // Predicated region
    $region22: #{tpu_custom_call.1} parent=1 // pred_check
      _
    $region23: #{tpu_custom_call.1} parent=1 // pred_check_branch
      %135 = sbr.rel (0) target = $region25
    $region24: #{tpu_custom_call.1} parent=1 // pred_region
      %s137 = ssub.s32 512, 512
      %138 = vsyncadd [#allocation4], %s137
      %s140 = sshll.u32 [#allocation5], 4
      %s141 = int_to_ptr.vmem [resolvable:$true] %s140
      %143 = dma.vmem_to_hbm [thread:$0]  %s141, 512, %s1, [#allocation4]
    $region25: #{tpu_custom_call.1} parent=1 // pred_fallthru
      _
    // Predicated region
    $region26: #{tpu_custom_call.1} parent=1 // pred_check
      _
    $region27: #{tpu_custom_call.1} parent=1 // pred_check_branch
      %145 = sbr.rel (0) target = $region29
    $region28: #{tpu_custom_call.1} parent=1 // pred_region
      %s147 = ssub.s32 512, 512
      %148 = vsyncadd [#allocation7], %s147
      %s150 = sshll.u32 [#allocation6], 4
      %s151 = int_to_ptr.vmem [resolvable:$true] %s150
      %153 = dma.vmem_to_hbm [thread:$0]  %s151, 512, %s2, [#allocation7]
    $region29: #{tpu_custom_call.1} parent=1 // pred_fallthru
      _
    // Predicated region
    $region30: #{tpu_custom_call.1} parent=1 // pred_check
      _
    $region31: #{tpu_custom_call.1} parent=1 // pred_check_branch
      %155 = sbr.rel (0) target = $region33
    $region32: #{tpu_custom_call.1} parent=1 // pred_region
      %156 = dma.done [#allocation4], 512
    $region33: #{tpu_custom_call.1} parent=1 // pred_fallthru
      _
    // Predicated region
    $region34: #{tpu_custom_call.1} parent=1 // pred_check
      _
    $region35: #{tpu_custom_call.1} parent=1 // pred_check_branch
      %158 = sbr.rel (0) target = $region37
    $region36: #{tpu_custom_call.1} parent=1 // pred_region
      %159 = dma.done [#allocation7], 512
    $region37: #{tpu_custom_call.1} parent=1 // pred_fallthru
      _
    %160 = vsyncpa [#allocation3], 1
    %161 = vsyncpa [#allocation4], 1
    %162 = vsyncpa [#allocation7], 1

</llo_original>
